<compile_context>
chip_gen: v6e
topology: v6e:2x2x1
jax: 0.10.0
libtpu: 0.0.40
codegen_flags: <defaults>
</compile_context>

<pallas_src>
import functools

import jax
import jax.numpy as jnp
from jax import lax
from jax.experimental import pallas as pl
from jax.experimental.pallas import tpu as pltpu

T_STEPS = 20          # inp.expand((20, *inp.shape)) -> same input every timestep
ALPHA = 0.9           # membrane decay (neuron_params)
THRESHOLD = 1.0       # firing threshold (neuron_params)
GEO_SUM = float(sum(ALPHA ** k for k in range(T_STEPS)))   # sum_{k=0}^{T-1} alpha^k


def snn_kernel(x_ref, w1_ref, b1_ref, w2_ref, b2_ref, out_ref, *, matmul_dtype):
    # Loop-invariant first layer, hoisted: cur1ᵀ = W1 · xᵀ + b1 -> (H, TB),
    # batch lane-dense.  (PyTorch recomputes this 20x on the same x.)
    cur1 = (jnp.dot(w1_ref[...].astype(matmul_dtype),
                    x_ref[...].astype(matmul_dtype),
                    preferred_element_type=jnp.float32)
            + b1_ref[...])                                  # (H,1) bcast over lanes

    def body(t, carry):
        mem1, spk_acc = carry
        mem = ALPHA * mem1 + cur1                           # leaky integrate (VPU, f32)
        spk = (mem > THRESHOLD).astype(jnp.float32)         # Heaviside spike (f32 compare)
        if THRESHOLD == 1.0:                                # trace-time constant fold:
            mem1 = mem - spk                                # soft reset, vmul saved
        else:
            mem1 = mem - spk * THRESHOLD
        # Output integrator is linear in spikes: accumulate alpha-weighted
        # spikes, defer the W2 matmul to the epilogue.
        spk_acc = ALPHA * spk_acc + spk
        return (mem1, spk_acc)

    zeros = jnp.zeros_like(cur1)
    # Carry is 3 small (H, TB) f32 arrays -> fits in vregs at these sizes, so
    # full unroll keeps the recurrence register-resident with LLO visibility.
    _, spk_acc = lax.fori_loop(0, T_STEPS, body, (zeros, zeros), unroll=True)

    # Single second-layer matmul; b2 already carries the analytic alpha
    # geometric sum (folded once at parameter setup).
    out_ref[...] = (jnp.dot(w2_ref[...].astype(matmul_dtype),
                            spk_acc.astype(matmul_dtype),
                            preferred_element_type=jnp.float32)
                    + b2_ref[...])                          # (D2,1) bcast over lanes


def feedforward_snn(x, w1, b1, w2, b2_folded, *, batch_tile=128,
                    matmul_dtype=jnp.float32):
    """Forward pass of FeedForwardSNN.

    x:         (B, D_in)            input (same every timestep, per the module)
    w1:        (H, D_in)            input_linear.weight  (PyTorch layout)
    b1:        (H,)                 input_linear.bias
    w2:        (D2, H)              linear_layers[0].weight (PyTorch layout)
    b2_folded: (D2,)                linear_layers[0].bias * GEO_SUM (fold once)
    returns    (B, D2)              output neuron membrane after 20 steps
    """
    B, d_in = x.shape
    H = w1.shape[0]
    D2 = w2.shape[0]
    TB = batch_tile                                   # lane tile; raise to 512+ for big B
    B_pad = ((B + TB - 1) // TB) * TB
    # Batch onto the 128-lane axis, zero-padded; padded columns are discarded.
    xT = jnp.pad(x, ((0, B_pad - B), (0, 0))).T       # (D_in, B_pad)

    kernel = functools.partial(snn_kernel, matmul_dtype=matmul_dtype)
    outT = pl.pallas_call(
        kernel,
        out_shape=jax.ShapeDtypeStruct((D2, B_pad), jnp.float32),
        grid_spec=pltpu.PrefetchScalarGridSpec(
            num_scalar_prefetch=0,
            grid=(B_pad // TB,),
            in_specs=[
                pl.BlockSpec((d_in, TB), lambda i: (0, i)),   # x tile, lane-dense batch
                pl.BlockSpec((H, d_in), lambda i: (0, 0)),    # W1: VMEM-resident
                pl.BlockSpec((H, 1), lambda i: (0, 0)),       # b1
                pl.BlockSpec((D2, H), lambda i: (0, 0)),      # W2: VMEM-resident
                pl.BlockSpec((D2, 1), lambda i: (0, 0)),      # b2 (pre-folded)
            ],
            out_specs=pl.BlockSpec((D2, TB), lambda i: (0, i)),
        ),
        compiler_params=pltpu.CompilerParams(
            dimension_semantics=("parallel",)),       # v7x: shard batch tiles over 2 TCs
    )(xT, w1, b1.reshape(-1, 1), w2, b2_folded.reshape(-1, 1))

    return outT[:, :B].T                              # (B, D2), drop batch padding


def reference(x, w1, b1, w2, b2):
    """Pure-JAX unrolled reference mirroring the PyTorch forward exactly
    (weights in nn.Linear layout: y = x @ W.T + b)."""
    B = x.shape[0]
    mem1 = jnp.zeros((B, w1.shape[0]), jnp.float32)
    mem_out = jnp.zeros((B, w2.shape[0]), jnp.float32)
    for _ in range(T_STEPS):
        cur1 = x @ w1.T + b1
        mem = ALPHA * mem1 + cur1
        spk = (mem > THRESHOLD).astype(jnp.float32)
        mem1 = mem - spk * THRESHOLD
        cur2 = spk @ w2.T + b2
        mem_out = ALPHA * mem_out + cur2
    return mem_out


if __name__ == "__main__":
    # architecture = [16, 32, 8]:
    #   input_linear 16->32, one hidden LIF, linear 32->8, output leaky integrator
    architecture = (16, 32, 8)
    B = 2
    key = jax.random.PRNGKey(0)
    kx, k1, kb1, k2, kb2 = jax.random.split(key, 5)

    x = jax.random.normal(kx, (B, architecture[0]), jnp.float32)

    # nn.Linear default init: U(-1/sqrt(fan_in), 1/sqrt(fan_in)); PyTorch layout.
    lim1 = float(1.0 / jnp.sqrt(jnp.float32(architecture[0])))
    w1 = jax.random.uniform(k1, (architecture[1], architecture[0]),
                            jnp.float32, -lim1, lim1)
    b1 = jax.random.uniform(kb1, (architecture[1],), jnp.float32, -lim1, lim1)
    lim2 = float(1.0 / jnp.sqrt(jnp.float32(architecture[1])))
    w2 = jax.random.uniform(k2, (architecture[2], architecture[1]),
                            jnp.float32, -lim2, lim2)
    b2 = jax.random.uniform(kb2, (architecture[2],), jnp.float32, -lim2, lim2)

    # Fold the analytic geometric bias sum ONCE at parameter setup.
    b2_folded = b2 * GEO_SUM

    out = jax.block_until_ready(feedforward_snn(x, w1, b1, w2, b2_folded))
    ref = reference(x, w1, b1, w2, b2)
    assert out.shape == (B, architecture[2])
    assert jnp.allclose(out, ref, atol=1e-4, rtol=1e-4)
    print("KERNEL_OK")
</pallas_src>

<mosaic_0001>
module attributes {stable_mosaic.version = 11 : i64} {
  func.func @snn_kernel(%arg0: i32, %arg1: memref<16x128xf32, #tpu.memory_space<vmem>>, %arg2: memref<32x16xf32, #tpu.memory_space<vmem>>, %arg3: memref<32x1xf32, #tpu.memory_space<vmem>>, %arg4: memref<8x32xf32, #tpu.memory_space<vmem>>, %arg5: memref<8x1xf32, #tpu.memory_space<vmem>>, %arg6: memref<8x128xf32, #tpu.memory_space<vmem>>) attributes {dimension_semantics = [#tpu.dimension_semantics<parallel>], iteration_bounds = array<i64: 1>, scalar_prefetch = 0 : i64, scratch_operands = 0 : i64, tpu.core_type = #tpu.core_type<tc>, window_params = [{transform_indices = @transform_0, window_bounds = array<i64: 16, 128>}, {pipeline_mode = #tpu.pipeline_mode<synchronous>, transform_indices = @transform_1, window_bounds = array<i64: 32, 16>}, {pipeline_mode = #tpu.pipeline_mode<synchronous>, transform_indices = @transform_2, window_bounds = array<i64: 32, 1>}, {pipeline_mode = #tpu.pipeline_mode<synchronous>, transform_indices = @transform_3, window_bounds = array<i64: 8, 32>}, {pipeline_mode = #tpu.pipeline_mode<synchronous>, transform_indices = @transform_4, window_bounds = array<i64: 8, 1>}, {transform_indices = @transform_5, window_bounds = array<i64: 8, 128>}]} {
    %c0 = arith.constant 0 : index
    %c0_0 = arith.constant 0 : index
    %0 = vector.load %arg2[%c0, %c0_0] : memref<32x16xf32, #tpu.memory_space<vmem>>, vector<32x16xf32>
    %c0_1 = arith.constant 0 : index
    %c0_2 = arith.constant 0 : index
    %1 = vector.load %arg1[%c0_1, %c0_2] : memref<16x128xf32, #tpu.memory_space<vmem>>, vector<16x128xf32>
    %cst = arith.constant dense<0.000000e+00> : vector<32x128xf32>
    %2 = tpu.matmul %0, %1, %cst {dimension_numbers = #tpu.dot_dimension_numbers<[1], [0], [0], [1], [0, 0, 1, 1], [], []>} : vector<32x16xf32>, vector<16x128xf32>, vector<32x128xf32> -> vector<32x128xf32>
    %c0_3 = arith.constant 0 : index
    %c0_4 = arith.constant 0 : index
    %3 = vector.load %arg3[%c0_3, %c0_4] : memref<32x1xf32, #tpu.memory_space<vmem>>, vector<32x1xf32>
    %4 = vector.broadcast %3 : vector<32x1xf32> to vector<32x128xf32>
    %5 = arith.addf %2, %4 : vector<32x128xf32>
    %cst_5 = arith.constant 0.000000e+00 : f32
    %6 = vector.broadcast %cst_5 : f32 to vector<32x128xf32>
    %c0_i32 = arith.constant 0 : i32
    %cst_6 = arith.constant 0.899999976 : f32
    %7 = vector.broadcast %cst_6 : f32 to vector<32x128xf32>
    %8 = arith.mulf %7, %6 : vector<32x128xf32>
    %9 = arith.addf %8, %5 : vector<32x128xf32>
    %cst_7 = arith.constant 1.000000e+00 : f32
    %10 = vector.broadcast %cst_7 : f32 to vector<32x128xf32>
    %11 = arith.cmpf ogt, %9, %10 : vector<32x128xf32>
    %12 = arith.extui %11 : vector<32x128xi1> to vector<32x128xi32>
    %13 = arith.sitofp %12 : vector<32x128xi32> to vector<32x128xf32>
    %14 = arith.subf %9, %13 : vector<32x128xf32>
    %cst_8 = arith.constant 0.899999976 : f32
    %15 = vector.broadcast %cst_8 : f32 to vector<32x128xf32>
    %16 = arith.mulf %15, %6 : vector<32x128xf32>
    %17 = arith.addf %16, %13 : vector<32x128xf32>
    %c1_i32 = arith.constant 1 : i32
    %cst_9 = arith.constant 0.899999976 : f32
    %18 = vector.broadcast %cst_9 : f32 to vector<32x128xf32>
    %19 = arith.mulf %18, %14 : vector<32x128xf32>
    %20 = arith.addf %19, %5 : vector<32x128xf32>
    %cst_10 = arith.constant 1.000000e+00 : f32
    %21 = vector.broadcast %cst_10 : f32 to vector<32x128xf32>
    %22 = arith.cmpf ogt, %20, %21 : vector<32x128xf32>
    %23 = arith.extui %22 : vector<32x128xi1> to vector<32x128xi32>
    %24 = arith.sitofp %23 : vector<32x128xi32> to vector<32x128xf32>
    %25 = arith.subf %20, %24 : vector<32x128xf32>
    %cst_11 = arith.constant 0.899999976 : f32
    %26 = vector.broadcast %cst_11 : f32 to vector<32x128xf32>
    %27 = arith.mulf %26, %17 : vector<32x128xf32>
    %28 = arith.addf %27, %24 : vector<32x128xf32>
    %c2_i32 = arith.constant 2 : i32
    %cst_12 = arith.constant 0.899999976 : f32
    %29 = vector.broadcast %cst_12 : f32 to vector<32x128xf32>
    %30 = arith.mulf %29, %25 : vector<32x128xf32>
    %31 = arith.addf %30, %5 : vector<32x128xf32>
    %cst_13 = arith.constant 1.000000e+00 : f32
    %32 = vector.broadcast %cst_13 : f32 to vector<32x128xf32>
    %33 = arith.cmpf ogt, %31, %32 : vector<32x128xf32>
    %34 = arith.extui %33 : vector<32x128xi1> to vector<32x128xi32>
    %35 = arith.sitofp %34 : vector<32x128xi32> to vector<32x128xf32>
    %36 = arith.subf %31, %35 : vector<32x128xf32>
    %cst_14 = arith.constant 0.899999976 : f32
    %37 = vector.broadcast %cst_14 : f32 to vector<32x128xf32>
    %38 = arith.mulf %37, %28 : vector<32x128xf32>
    %39 = arith.addf %38, %35 : vector<32x128xf32>
    %c3_i32 = arith.constant 3 : i32
    %cst_15 = arith.constant 0.899999976 : f32
    %40 = vector.broadcast %cst_15 : f32 to vector<32x128xf32>
    %41 = arith.mulf %40, %36 : vector<32x128xf32>
    %42 = arith.addf %41, %5 : vector<32x128xf32>
    %cst_16 = arith.constant 1.000000e+00 : f32
    %43 = vector.broadcast %cst_16 : f32 to vector<32x128xf32>
    %44 = arith.cmpf ogt, %42, %43 : vector<32x128xf32>
    %45 = arith.extui %44 : vector<32x128xi1> to vector<32x128xi32>
    %46 = arith.sitofp %45 : vector<32x128xi32> to vector<32x128xf32>
    %47 = arith.subf %42, %46 : vector<32x128xf32>
    %cst_17 = arith.constant 0.899999976 : f32
    %48 = vector.broadcast %cst_17 : f32 to vector<32x128xf32>
    %49 = arith.mulf %48, %39 : vector<32x128xf32>
    %50 = arith.addf %49, %46 : vector<32x128xf32>
    %c4_i32 = arith.constant 4 : i32
    %cst_18 = arith.constant 0.899999976 : f32
    %51 = vector.broadcast %cst_18 : f32 to vector<32x128xf32>
    %52 = arith.mulf %51, %47 : vector<32x128xf32>
    %53 = arith.addf %52, %5 : vector<32x128xf32>
    %cst_19 = arith.constant 1.000000e+00 : f32
    %54 = vector.broadcast %cst_19 : f32 to vector<32x128xf32>
    %55 = arith.cmpf ogt, %53, %54 : vector<32x128xf32>
    %56 = arith.extui %55 : vector<32x128xi1> to vector<32x128xi32>
    %57 = arith.sitofp %56 : vector<32x128xi32> to vector<32x128xf32>
    %58 = arith.subf %53, %57 : vector<32x128xf32>
    %cst_20 = arith.constant 0.899999976 : f32
    %59 = vector.broadcast %cst_20 : f32 to vector<32x128xf32>
    %60 = arith.mulf %59, %50 : vector<32x128xf32>
    %61 = arith.addf %60, %57 : vector<32x128xf32>
    %c5_i32 = arith.constant 5 : i32
    %cst_21 = arith.constant 0.899999976 : f32
    %62 = vector.broadcast %cst_21 : f32 to vector<32x128xf32>
    %63 = arith.mulf %62, %58 : vector<32x128xf32>
    %64 = arith.addf %63, %5 : vector<32x128xf32>
    %cst_22 = arith.constant 1.000000e+00 : f32
    %65 = vector.broadcast %cst_22 : f32 to vector<32x128xf32>
    %66 = arith.cmpf ogt, %64, %65 : vector<32x128xf32>
    %67 = arith.extui %66 : vector<32x128xi1> to vector<32x128xi32>
    %68 = arith.sitofp %67 : vector<32x128xi32> to vector<32x128xf32>
    %69 = arith.subf %64, %68 : vector<32x128xf32>
    %cst_23 = arith.constant 0.899999976 : f32
    %70 = vector.broadcast %cst_23 : f32 to vector<32x128xf32>
    %71 = arith.mulf %70, %61 : vector<32x128xf32>
    %72 = arith.addf %71, %68 : vector<32x128xf32>
    %c6_i32 = arith.constant 6 : i32
    %cst_24 = arith.constant 0.899999976 : f32
    %73 = vector.broadcast %cst_24 : f32 to vector<32x128xf32>
    %74 = arith.mulf %73, %69 : vector<32x128xf32>
    %75 = arith.addf %74, %5 : vector<32x128xf32>
    %cst_25 = arith.constant 1.000000e+00 : f32
    %76 = vector.broadcast %cst_25 : f32 to vector<32x128xf32>
    %77 = arith.cmpf ogt, %75, %76 : vector<32x128xf32>
    %78 = arith.extui %77 : vector<32x128xi1> to vector<32x128xi32>
    %79 = arith.sitofp %78 : vector<32x128xi32> to vector<32x128xf32>
    %80 = arith.subf %75, %79 : vector<32x128xf32>
    %cst_26 = arith.constant 0.899999976 : f32
    %81 = vector.broadcast %cst_26 : f32 to vector<32x128xf32>
    %82 = arith.mulf %81, %72 : vector<32x128xf32>
    %83 = arith.addf %82, %79 : vector<32x128xf32>
    %c7_i32 = arith.constant 7 : i32
    %cst_27 = arith.constant 0.899999976 : f32
    %84 = vector.broadcast %cst_27 : f32 to vector<32x128xf32>
    %85 = arith.mulf %84, %80 : vector<32x128xf32>
    %86 = arith.addf %85, %5 : vector<32x128xf32>
    %cst_28 = arith.constant 1.000000e+00 : f32
    %87 = vector.broadcast %cst_28 : f32 to vector<32x128xf32>
    %88 = arith.cmpf ogt, %86, %87 : vector<32x128xf32>
    %89 = arith.extui %88 : vector<32x128xi1> to vector<32x128xi32>
    %90 = arith.sitofp %89 : vector<32x128xi32> to vector<32x128xf32>
    %91 = arith.subf %86, %90 : vector<32x128xf32>
    %cst_29 = arith.constant 0.899999976 : f32
    %92 = vector.broadcast %cst_29 : f32 to vector<32x128xf32>
    %93 = arith.mulf %92, %83 : vector<32x128xf32>
    %94 = arith.addf %93, %90 : vector<32x128xf32>
    %c8_i32 = arith.constant 8 : i32
    %cst_30 = arith.constant 0.899999976 : f32
    %95 = vector.broadcast %cst_30 : f32 to vector<32x128xf32>
    %96 = arith.mulf %95, %91 : vector<32x128xf32>
    %97 = arith.addf %96, %5 : vector<32x128xf32>
    %cst_31 = arith.constant 1.000000e+00 : f32
    %98 = vector.broadcast %cst_31 : f32 to vector<32x128xf32>
    %99 = arith.cmpf ogt, %97, %98 : vector<32x128xf32>
    %100 = arith.extui %99 : vector<32x128xi1> to vector<32x128xi32>
    %101 = arith.sitofp %100 : vector<32x128xi32> to vector<32x128xf32>
    %102 = arith.subf %97, %101 : vector<32x128xf32>
    %cst_32 = arith.constant 0.899999976 : f32
    %103 = vector.broadcast %cst_32 : f32 to vector<32x128xf32>
    %104 = arith.mulf %103, %94 : vector<32x128xf32>
    %105 = arith.addf %104, %101 : vector<32x128xf32>
    %c9_i32 = arith.constant 9 : i32
    %cst_33 = arith.constant 0.899999976 : f32
    %106 = vector.broadcast %cst_33 : f32 to vector<32x128xf32>
    %107 = arith.mulf %106, %102 : vector<32x128xf32>
    %108 = arith.addf %107, %5 : vector<32x128xf32>
    %cst_34 = arith.constant 1.000000e+00 : f32
    %109 = vector.broadcast %cst_34 : f32 to vector<32x128xf32>
    %110 = arith.cmpf ogt, %108, %109 : vector<32x128xf32>
    %111 = arith.extui %110 : vector<32x128xi1> to vector<32x128xi32>
    %112 = arith.sitofp %111 : vector<32x128xi32> to vector<32x128xf32>
    %113 = arith.subf %108, %112 : vector<32x128xf32>
    %cst_35 = arith.constant 0.899999976 : f32
    %114 = vector.broadcast %cst_35 : f32 to vector<32x128xf32>
    %115 = arith.mulf %114, %105 : vector<32x128xf32>
    %116 = arith.addf %115, %112 : vector<32x128xf32>
    %c10_i32 = arith.constant 10 : i32
    %cst_36 = arith.constant 0.899999976 : f32
    %117 = vector.broadcast %cst_36 : f32 to vector<32x128xf32>
    %118 = arith.mulf %117, %113 : vector<32x128xf32>
    %119 = arith.addf %118, %5 : vector<32x128xf32>
    %cst_37 = arith.constant 1.000000e+00 : f32
    %120 = vector.broadcast %cst_37 : f32 to vector<32x128xf32>
    %121 = arith.cmpf ogt, %119, %120 : vector<32x128xf32>
    %122 = arith.extui %121 : vector<32x128xi1> to vector<32x128xi32>
    %123 = arith.sitofp %122 : vector<32x128xi32> to vector<32x128xf32>
    %124 = arith.subf %119, %123 : vector<32x128xf32>
    %cst_38 = arith.constant 0.899999976 : f32
    %125 = vector.broadcast %cst_38 : f32 to vector<32x128xf32>
    %126 = arith.mulf %125, %116 : vector<32x128xf32>
    %127 = arith.addf %126, %123 : vector<32x128xf32>
    %c11_i32 = arith.constant 11 : i32
    %cst_39 = arith.constant 0.899999976 : f32
    %128 = vector.broadcast %cst_39 : f32 to vector<32x128xf32>
    %129 = arith.mulf %128, %124 : vector<32x128xf32>
    %130 = arith.addf %129, %5 : vector<32x128xf32>
    %cst_40 = arith.constant 1.000000e+00 : f32
    %131 = vector.broadcast %cst_40 : f32 to vector<32x128xf32>
    %132 = arith.cmpf ogt, %130, %131 : vector<32x128xf32>
    %133 = arith.extui %132 : vector<32x128xi1> to vector<32x128xi32>
    %134 = arith.sitofp %133 : vector<32x128xi32> to vector<32x128xf32>
    %135 = arith.subf %130, %134 : vector<32x128xf32>
    %cst_41 = arith.constant 0.899999976 : f32
    %136 = vector.broadcast %cst_41 : f32 to vector<32x128xf32>
    %137 = arith.mulf %136, %127 : vector<32x128xf32>
    %138 = arith.addf %137, %134 : vector<32x128xf32>
    %c12_i32 = arith.constant 12 : i32
    %cst_42 = arith.constant 0.899999976 : f32
    %139 = vector.broadcast %cst_42 : f32 to vector<32x128xf32>
    %140 = arith.mulf %139, %135 : vector<32x128xf32>
    %141 = arith.addf %140, %5 : vector<32x128xf32>
    %cst_43 = arith.constant 1.000000e+00 : f32
    %142 = vector.broadcast %cst_43 : f32 to vector<32x128xf32>
    %143 = arith.cmpf ogt, %141, %142 : vector<32x128xf32>
    %144 = arith.extui %143 : vector<32x128xi1> to vector<32x128xi32>
    %145 = arith.sitofp %144 : vector<32x128xi32> to vector<32x128xf32>
    %146 = arith.subf %141, %145 : vector<32x128xf32>
    %cst_44 = arith.constant 0.899999976 : f32
    %147 = vector.broadcast %cst_44 : f32 to vector<32x128xf32>
    %148 = arith.mulf %147, %138 : vector<32x128xf32>
    %149 = arith.addf %148, %145 : vector<32x128xf32>
    %c13_i32 = arith.constant 13 : i32
    %cst_45 = arith.constant 0.899999976 : f32
    %150 = vector.broadcast %cst_45 : f32 to vector<32x128xf32>
    %151 = arith.mulf %150, %146 : vector<32x128xf32>
    %152 = arith.addf %151, %5 : vector<32x128xf32>
    %cst_46 = arith.constant 1.000000e+00 : f32
    %153 = vector.broadcast %cst_46 : f32 to vector<32x128xf32>
    %154 = arith.cmpf ogt, %152, %153 : vector<32x128xf32>
    %155 = arith.extui %154 : vector<32x128xi1> to vector<32x128xi32>
    %156 = arith.sitofp %155 : vector<32x128xi32> to vector<32x128xf32>
    %157 = arith.subf %152, %156 : vector<32x128xf32>
    %cst_47 = arith.constant 0.899999976 : f32
    %158 = vector.broadcast %cst_47 : f32 to vector<32x128xf32>
    %159 = arith.mulf %158, %149 : vector<32x128xf32>
    %160 = arith.addf %159, %156 : vector<32x128xf32>
    %c14_i32 = arith.constant 14 : i32
    %cst_48 = arith.constant 0.899999976 : f32
    %161 = vector.broadcast %cst_48 : f32 to vector<32x128xf32>
    %162 = arith.mulf %161, %157 : vector<32x128xf32>
    %163 = arith.addf %162, %5 : vector<32x128xf32>
    %cst_49 = arith.constant 1.000000e+00 : f32
    %164 = vector.broadcast %cst_49 : f32 to vector<32x128xf32>
    %165 = arith.cmpf ogt, %163, %164 : vector<32x128xf32>
    %166 = arith.extui %165 : vector<32x128xi1> to vector<32x128xi32>
    %167 = arith.sitofp %166 : vector<32x128xi32> to vector<32x128xf32>
    %168 = arith.subf %163, %167 : vector<32x128xf32>
    %cst_50 = arith.constant 0.899999976 : f32
    %169 = vector.broadcast %cst_50 : f32 to vector<32x128xf32>
    %170 = arith.mulf %169, %160 : vector<32x128xf32>
    %171 = arith.addf %170, %167 : vector<32x128xf32>
    %c15_i32 = arith.constant 15 : i32
    %cst_51 = arith.constant 0.899999976 : f32
    %172 = vector.broadcast %cst_51 : f32 to vector<32x128xf32>
    %173 = arith.mulf %172, %168 : vector<32x128xf32>
    %174 = arith.addf %173, %5 : vector<32x128xf32>
    %cst_52 = arith.constant 1.000000e+00 : f32
    %175 = vector.broadcast %cst_52 : f32 to vector<32x128xf32>
    %176 = arith.cmpf ogt, %174, %175 : vector<32x128xf32>
    %177 = arith.extui %176 : vector<32x128xi1> to vector<32x128xi32>
    %178 = arith.sitofp %177 : vector<32x128xi32> to vector<32x128xf32>
    %179 = arith.subf %174, %178 : vector<32x128xf32>
    %cst_53 = arith.constant 0.899999976 : f32
    %180 = vector.broadcast %cst_53 : f32 to vector<32x128xf32>
    %181 = arith.mulf %180, %171 : vector<32x128xf32>
    %182 = arith.addf %181, %178 : vector<32x128xf32>
    %c16_i32 = arith.constant 16 : i32
    %cst_54 = arith.constant 0.899999976 : f32
    %183 = vector.broadcast %cst_54 : f32 to vector<32x128xf32>
    %184 = arith.mulf %183, %179 : vector<32x128xf32>
    %185 = arith.addf %184, %5 : vector<32x128xf32>
    %cst_55 = arith.constant 1.000000e+00 : f32
    %186 = vector.broadcast %cst_55 : f32 to vector<32x128xf32>
    %187 = arith.cmpf ogt, %185, %186 : vector<32x128xf32>
    %188 = arith.extui %187 : vector<32x128xi1> to vector<32x128xi32>
    %189 = arith.sitofp %188 : vector<32x128xi32> to vector<32x128xf32>
    %190 = arith.subf %185, %189 : vector<32x128xf32>
    %cst_56 = arith.constant 0.899999976 : f32
    %191 = vector.broadcast %cst_56 : f32 to vector<32x128xf32>
    %192 = arith.mulf %191, %182 : vector<32x128xf32>
    %193 = arith.addf %192, %189 : vector<32x128xf32>
    %c17_i32 = arith.constant 17 : i32
    %cst_57 = arith.constant 0.899999976 : f32
    %194 = vector.broadcast %cst_57 : f32 to vector<32x128xf32>
    %195 = arith.mulf %194, %190 : vector<32x128xf32>
    %196 = arith.addf %195, %5 : vector<32x128xf32>
    %cst_58 = arith.constant 1.000000e+00 : f32
    %197 = vector.broadcast %cst_58 : f32 to vector<32x128xf32>
    %198 = arith.cmpf ogt, %196, %197 : vector<32x128xf32>
    %199 = arith.extui %198 : vector<32x128xi1> to vector<32x128xi32>
    %200 = arith.sitofp %199 : vector<32x128xi32> to vector<32x128xf32>
    %201 = arith.subf %196, %200 : vector<32x128xf32>
    %cst_59 = arith.constant 0.899999976 : f32
    %202 = vector.broadcast %cst_59 : f32 to vector<32x128xf32>
    %203 = arith.mulf %202, %193 : vector<32x128xf32>
    %204 = arith.addf %203, %200 : vector<32x128xf32>
    %c18_i32 = arith.constant 18 : i32
    %cst_60 = arith.constant 0.899999976 : f32
    %205 = vector.broadcast %cst_60 : f32 to vector<32x128xf32>
    %206 = arith.mulf %205, %201 : vector<32x128xf32>
    %207 = arith.addf %206, %5 : vector<32x128xf32>
    %cst_61 = arith.constant 1.000000e+00 : f32
    %208 = vector.broadcast %cst_61 : f32 to vector<32x128xf32>
    %209 = arith.cmpf ogt, %207, %208 : vector<32x128xf32>
    %210 = arith.extui %209 : vector<32x128xi1> to vector<32x128xi32>
    %211 = arith.sitofp %210 : vector<32x128xi32> to vector<32x128xf32>
    %212 = arith.subf %207, %211 : vector<32x128xf32>
    %cst_62 = arith.constant 0.899999976 : f32
    %213 = vector.broadcast %cst_62 : f32 to vector<32x128xf32>
    %214 = arith.mulf %213, %204 : vector<32x128xf32>
    %215 = arith.addf %214, %211 : vector<32x128xf32>
    %c19_i32 = arith.constant 19 : i32
    %cst_63 = arith.constant 0.899999976 : f32
    %216 = vector.broadcast %cst_63 : f32 to vector<32x128xf32>
    %217 = arith.mulf %216, %212 : vector<32x128xf32>
    %218 = arith.addf %217, %5 : vector<32x128xf32>
    %cst_64 = arith.constant 1.000000e+00 : f32
    %219 = vector.broadcast %cst_64 : f32 to vector<32x128xf32>
    %220 = arith.cmpf ogt, %218, %219 : vector<32x128xf32>
    %221 = arith.extui %220 : vector<32x128xi1> to vector<32x128xi32>
    %222 = arith.sitofp %221 : vector<32x128xi32> to vector<32x128xf32>
    %223 = arith.subf %218, %222 : vector<32x128xf32>
    %cst_65 = arith.constant 0.899999976 : f32
    %224 = vector.broadcast %cst_65 : f32 to vector<32x128xf32>
    %225 = arith.mulf %224, %215 : vector<32x128xf32>
    %226 = arith.addf %225, %222 : vector<32x128xf32>
    %c0_66 = arith.constant 0 : index
    %c0_67 = arith.constant 0 : index
    %227 = vector.load %arg4[%c0_66, %c0_67] : memref<8x32xf32, #tpu.memory_space<vmem>>, vector<8x32xf32>
    %cst_68 = arith.constant dense<0.000000e+00> : vector<8x128xf32>
    %228 = tpu.matmul %227, %226, %cst_68 {dimension_numbers = #tpu.dot_dimension_numbers<[1], [0], [0], [1], [0, 0, 1, 1], [], []>} : vector<8x32xf32>, vector<32x128xf32>, vector<8x128xf32> -> vector<8x128xf32>
    %c0_69 = arith.constant 0 : index
    %c0_70 = arith.constant 0 : index
    %229 = vector.load %arg5[%c0_69, %c0_70] : memref<8x1xf32, #tpu.memory_space<vmem>>, vector<8x1xf32>
    %230 = vector.broadcast %229 : vector<8x1xf32> to vector<8x128xf32>
    %231 = arith.addf %228, %230 : vector<8x128xf32>
    %c0_71 = arith.constant 0 : index
    %c0_72 = arith.constant 0 : index
    %232 = vector.load %arg6[%c0_71, %c0_72] : memref<8x128xf32, #tpu.memory_space<vmem>>, vector<8x128xf32>
    tpu.vector_store %arg6[%c0_71, %c0_72], %231 {strides = array<i32>} : memref<8x128xf32, #tpu.memory_space<vmem>>, vector<8x128xf32>,
    return
  }
  func.func @transform_0(%arg0: i32) -> (i32, i32) {
    %c0_i32 = arith.constant 0 : i32
    %c0_i32_0 = arith.constant 0 : i32
    return %c0_i32, %arg0 : i32, i32
  }
  func.func @transform_1(%arg0: i32) -> (i32, i32) {
    %c0_i32 = arith.constant 0 : i32
    %c0_i32_0 = arith.constant 0 : i32
    %c0_i32_1 = arith.constant 0 : i32
    return %c0_i32, %c0_i32_0 : i32, i32
  }
  func.func @transform_2(%arg0: i32) -> (i32, i32) {
    %c0_i32 = arith.constant 0 : i32
    %c0_i32_0 = arith.constant 0 : i32
    %c0_i32_1 = arith.constant 0 : i32
    return %c0_i32, %c0_i32_0 : i32, i32
  }
  func.func @transform_3(%arg0: i32) -> (i32, i32) {
    %c0_i32 = arith.constant 0 : i32
    %c0_i32_0 = arith.constant 0 : i32
    %c0_i32_1 = arith.constant 0 : i32
    return %c0_i32, %c0_i32_0 : i32, i32
  }
  func.func @transform_4(%arg0: i32) -> (i32, i32) {
    %c0_i32 = arith.constant 0 : i32
    %c0_i32_0 = arith.constant 0 : i32
    %c0_i32_1 = arith.constant 0 : i32
    return %c0_i32, %c0_i32_0 : i32, i32
  }
  func.func @transform_5(%arg0: i32) -> (i32, i32) {
    %c0_i32 = arith.constant 0 : i32
    %c0_i32_0 = arith.constant 0 : i32
    return %c0_i32, %arg0 : i32, i32
  }
}

</mosaic_0001>

<llo_original>
// kernel: tpu_custom_call.1
$region0: #{tpu_custom_call.1}
  #allocation0 [shape = 'u32[]', space=smem, size = 0x4, offset = 0x4, fixed_abs, tag = 'smem constant byte address 0x4 - core index']
  #allocation1 [shape = 'u32[144,128]{1,0:T(1,128)}', space=vmem, size = 0x12000, scoped, tag = 'internal scratch']
  %s0 = inlined_call_operand.vmem [shape: f32[16,128], index: 0, kind: input, shape index: {}]
  %s1 = inlined_call_operand.vmem [shape: f32[32,16], index: 1, kind: input, shape index: {}]
  %s2 = inlined_call_operand.vmem [shape: f32[32,1], index: 2, kind: input, shape index: {}]
  %s3 = inlined_call_operand.vmem [shape: f32[8,32], index: 3, kind: input, shape index: {}]
  %s4 = inlined_call_operand.vmem [shape: f32[8,1], index: 4, kind: input, shape index: {}]
  %s5 = inlined_call_operand.hbm [shape: f32[8,128], index: 5, kind: output, shape index: {}]
  %s6 = sld [smem:[#allocation0]]
  $region30: #{tpu_custom_call.1} parent=0
    _
  %s8 = ssub.s32 1, %s6
  %s9 = scalar_select 0, %s8, %s6
  $region1: #{tpu_custom_call.1} parent=0
    #allocation2 [shape = 'u8[4096]{0}', space=vmem, size = 0x1000, scoped, tag = 'output window, operand 0, single buffered']
    #allocation3 [shape = 's32[1]{0}', space=sflag, size = 0x4, scoped, tag = 'scoped memory for tpu_custom_call.1']
    %10 = vsyncpa [#allocation3], 0
    // Predicated region
    $region2: #{tpu_custom_call.1} parent=1 // pred_check
      _
    $region3: #{tpu_custom_call.1} parent=1 // pred_check_branch
      %12 = sbr.rel (0) target = $region5
    $region4: #{tpu_custom_call.1} parent=1 // pred_region
      _
    $region5: #{tpu_custom_call.1} parent=1 // pred_fallthru
      _
    // Predicated region
    $region6: #{tpu_custom_call.1} parent=1 // pred_check
      _
    $region7: #{tpu_custom_call.1} parent=1 // pred_check_branch
      %14 = sbr.rel (0) target = $region9
    $region8: #{tpu_custom_call.1} parent=1 // pred_region
      _
    $region9: #{tpu_custom_call.1} parent=1 // pred_fallthru
      _
    // Predicated region
    $region10: #{tpu_custom_call.1} parent=1 // pred_check
      _
    $region11: #{tpu_custom_call.1} parent=1 // pred_check_branch
      %16 = sbr.rel (0) target = $region13
    $region12: #{tpu_custom_call.1} parent=1 // pred_region
      _
    $region13: #{tpu_custom_call.1} parent=1 // pred_fallthru
      _
    // Predicated region
    $region14: #{tpu_custom_call.1} parent=1 // pred_check
      _
    $region15: #{tpu_custom_call.1} parent=1 // pred_check_branch
      %18 = sbr.rel (0) target = $region17
    $region16: #{tpu_custom_call.1} parent=1 // pred_region
      _
    $region17: #{tpu_custom_call.1} parent=1 // pred_fallthru
      _
    // Predicated region
    $region18: #{tpu_custom_call.1} parent=1 // pred_check
      _
    $region19: #{tpu_custom_call.1} parent=1 // pred_check_branch
      %20 = sbr.rel (0) target = $region21
    $region20: #{tpu_custom_call.1} parent=1 // pred_region
      _
    $region21: #{tpu_custom_call.1} parent=1 // pred_fallthru
      _
    %v21 = vld [vmem:[%s1] sm:$0xff]
    %v22 = vld [vmem:[%s1 + $0x8] sm:$0xff]
    %v23 = vld [vmem:[%s1 + $0x10] sm:$0xff]
    %v24 = vld [vmem:[%s1 + $0x18] sm:$0xff]
    %v25 = vld [vmem:[%s0] sm:$0xff]
    %v26 = vld [vmem:[%s0 + $0x8] sm:$0xff]
    %v27 = vld [vmem:[%s2] sm:$0xff]
    %v28 = vld [vmem:[%s2 + $0x8] sm:$0xff]
    %v29 = vld [vmem:[%s2 + $0x10] sm:$0xff]
    %v30 = vld [vmem:[%s2 + $0x18] sm:$0xff]
    %32 = vset.pattern.permute.xlu0 0
    %33 = vperm.xlu0 %32, %v27
    %v34 = vpop.permute.xlu0 %33
    %37 = vset.pattern.permute.xlu0 0
    %38 = vperm.xlu0 %37, %v28
    %v39 = vpop.permute.xlu0 %38
    %42 = vset.pattern.permute.xlu0 0
    %43 = vperm.xlu0 %42, %v29
    %v44 = vpop.permute.xlu0 %43
    %47 = vset.pattern.permute.xlu0 0
    %48 = vperm.xlu0 %47, %v30
    %v49 = vpop.permute.xlu0 %48
    %vm51 = vcmask 130048
    %v53 = vsel %vm51, %v21, 0
    %v56 = vsel %vm51, %v22, 0
    %v59 = vsel %vm51, %v23, 0
    %v62 = vsel %vm51, %v24, 0
    %64 = vmatprep.subr.mxu0 0.0
    %65 = vmatpush1.msra.mxu0 0.0
    %66 = vmatprep.subr.mxu0 0.0
    %67 = vmatpush1.msra.mxu0 0.0
    %68 = vmatprep.subr.mxu0 0.0
    %69 = vmatpush1.msra.mxu0 0.0
    %70 = vmatprep.subr.mxu0 0.0
    %71 = vmatpush1.msra.mxu0 0.0
    %72 = vmatprep.subr.mxu0 0.0
    %73 = vmatpush1.msra.mxu0 0.0
    %74 = vmatprep.subr.mxu0 0.0
    %75 = vmatpush1.msra.mxu0 0.0
    %76 = vmatprep.subr.mxu0 0.0
    %77 = vmatpush1.msra.mxu0 0.0
    %78 = vmatprep.subr.mxu0 0.0
    %79 = vmatpush1.msra.mxu0 0.0
    %80 = vmatprep.subr.mxu0 0.0
    %81 = vmatpush1.msra.mxu0 0.0
    %82 = vmatprep.subr.mxu0 0.0
    %83 = vmatpush1.msra.mxu0 0.0
    %84 = vmatprep.subr.mxu0 0.0
    %85 = vmatpush1.msra.mxu0 0.0
    %86 = vmatprep.subr.mxu0 0.0
    %87 = vmatpush1.msra.mxu0 0.0
    %88 = vmatprep.subr.mxu0 0.0
    %89 = vmatpush1.msra.mxu0 0.0
    %90 = vmatprep.subr.mxu0 0.0
    %91 = vmatpush1.msra.mxu0 0.0
    %92 = vmatprep.subr.mxu0 0.0
    %93 = vmatpush1.msra.mxu0 %v26
    %94 = vmatprep.subr.mxu0 0.0
    %95 = vmatpush1.msra.mxu0 %v25
    %96 = vmatprep.subr.mxu0 0.0
    %97 = vmatpush2.msra.mxu0 0.0
    %98 = vmatprep.subr.mxu0 0.0
    %99 = vmatpush2.msra.mxu0 0.0
    %100 = vmatprep.subr.mxu0 0.0
    %101 = vmatpush2.msra.mxu0 0.0
    %102 = vmatprep.subr.mxu0 0.0
    %103 = vmatpush2.msra.mxu0 0.0
    %104 = vmatprep.subr.mxu0 0.0
    %105 = vmatpush2.msra.mxu0 0.0
    %106 = vmatprep.subr.mxu0 0.0
    %107 = vmatpush2.msra.mxu0 0.0
    %108 = vmatprep.subr.mxu0 0.0
    %109 = vmatpush2.msra.mxu0 0.0
    %110 = vmatprep.subr.mxu0 0.0
    %111 = vmatpush2.msra.mxu0 0.0
    %112 = vmatprep.subr.mxu0 0.0
    %113 = vmatpush2.msra.mxu0 0.0
    %114 = vmatprep.subr.mxu0 0.0
    %115 = vmatpush2.msra.mxu0 0.0
    %116 = vmatprep.subr.mxu0 0.0
    %117 = vmatpush2.msra.mxu0 0.0
    %118 = vmatprep.subr.mxu0 0.0
    %119 = vmatpush2.msra.mxu0 0.0
    %120 = vmatprep.subr.mxu0 0.0
    %121 = vmatpush2.msra.mxu0 0.0
    %122 = vmatprep.subr.mxu0 0.0
    %123 = vmatpush2.msra.mxu0 0.0
    %124 = vmatprep.subr.mxu0 0.0
    %125 = vmatpush2.msra.mxu0 0.0
    %126 = vmatprep.subr.mxu0 0.0
    %127 = vmatpush2.msra.mxu0 0.0
    %128 = vmatprep.mubr.f32.mxu0 0.0
    %129 = vmatmul.mubr.f32.gmra.mxu0 %v53
    %v130 = vpop.f32.mrf.mxu0
    %v131 = vadd.f32 %v34, %v130
    %v132 = vpop.f32.mrf.mxu0
    %133 = vmatprep.mubr.f32.mxu0 0.0
    %134 = vmatmul.mubr.f32.gmra.mxu0 %v56
    %v135 = vpop.f32.mrf.mxu0
    %v136 = vadd.f32 %v39, %v135
    %v137 = vpop.f32.mrf.mxu0
    %138 = vmatprep.mubr.f32.mxu0 0.0
    %139 = vmatmul.mubr.f32.gmra.mxu0 %v59
    %v140 = vpop.f32.mrf.mxu0
    %v141 = vadd.f32 %v44, %v140
    %v142 = vpop.f32.mrf.mxu0
    %143 = vmatprep.mubr.f32.mxu0 0.0
    %144 = vmatmul.mubr.f32.gmra.mxu0 %v62
    %v145 = vpop.f32.mrf.mxu0
    %v146 = vadd.f32 %v49, %v145
    %v147 = vpop.f32.mrf.mxu0
    %148 = vdwg.mxu0
    %v149 = vadd.f32 %v131, 0.0
    %v150 = vadd.f32 %v136, 0.0
    %v151 = vadd.f32 %v141, 0.0
    %v152 = vadd.f32 %v146, 0.0
    %vm153 = vcmp.gt.f32.partialorder %v149, 1.0
    %vm154 = vcmp.gt.f32.partialorder %v150, 1.0
    %vm155 = vcmp.gt.f32.partialorder %v151, 1.0
    %vm156 = vcmp.gt.f32.partialorder %v152, 1.0
    %v157 = vsel %vm153, 1, 0
    %v158 = vsel %vm154, 1, 0
    %v159 = vsel %vm155, 1, 0
    %v160 = vsel %vm156, 1, 0
    %v161 = vcvt.s32.f32 %v157
    %v162 = vcvt.s32.f32 %v158
    %v163 = vcvt.s32.f32 %v159
    %v164 = vcvt.s32.f32 %v160
    %v165 = vsub.f32 %v149, %v161
    %v166 = vsub.f32 %v150, %v162
    %v167 = vsub.f32 %v151, %v163
    %v168 = vsub.f32 %v152, %v164
    %v169 = vadd.f32 %v161, 0.0
    %v170 = vadd.f32 %v162, 0.0
    %v171 = vadd.f32 %v163, 0.0
    %v172 = vadd.f32 %v164, 0.0
    %v173 = vmul.f32 %v165, 0.9
    %v174 = vmul.f32 %v166, 0.9
    %v175 = vmul.f32 %v167, 0.9
    %v176 = vmul.f32 %v168, 0.9
    %v177 = vadd.f32 %v173, %v131
    %v178 = vadd.f32 %v174, %v136
    %v179 = vadd.f32 %v175, %v141
    %v180 = vadd.f32 %v176, %v146
    %vm181 = vcmp.gt.f32.partialorder %v177, 1.0
    %vm182 = vcmp.gt.f32.partialorder %v178, 1.0
    %vm183 = vcmp.gt.f32.partialorder %v179, 1.0
    %vm184 = vcmp.gt.f32.partialorder %v180, 1.0
    %v185 = vsel %vm181, 1, 0
    %v186 = vsel %vm182, 1, 0
    %v187 = vsel %vm183, 1, 0
    %v188 = vsel %vm184, 1, 0
    %v189 = vcvt.s32.f32 %v185
    %v190 = vcvt.s32.f32 %v186
    %v191 = vcvt.s32.f32 %v187
    %v192 = vcvt.s32.f32 %v188
    %v193 = vsub.f32 %v177, %v189
    %v194 = vsub.f32 %v178, %v190
    %v195 = vsub.f32 %v179, %v191
    %v196 = vsub.f32 %v180, %v192
    %v197 = vmul.f32 %v169, 0.9
    %v198 = vmul.f32 %v170, 0.9
    %v199 = vmul.f32 %v171, 0.9
    %v200 = vmul.f32 %v172, 0.9
    %v201 = vadd.f32 %v197, %v189
    %v202 = vadd.f32 %v198, %v190
    %v203 = vadd.f32 %v199, %v191
    %v204 = vadd.f32 %v200, %v192
    %v205 = vmul.f32 %v193, 0.9
    %v206 = vmul.f32 %v194, 0.9
    %v207 = vmul.f32 %v195, 0.9
    %v208 = vmul.f32 %v196, 0.9
    %v209 = vadd.f32 %v205, %v131
    %v210 = vadd.f32 %v206, %v136
    %v211 = vadd.f32 %v207, %v141
    %v212 = vadd.f32 %v208, %v146
    %vm213 = vcmp.gt.f32.partialorder %v209, 1.0
    %vm214 = vcmp.gt.f32.partialorder %v210, 1.0
    %vm215 = vcmp.gt.f32.partialorder %v211, 1.0
    %vm216 = vcmp.gt.f32.partialorder %v212, 1.0
    %v217 = vsel %vm213, 1, 0
    %v218 = vsel %vm214, 1, 0
    %v219 = vsel %vm215, 1, 0
    %v220 = vsel %vm216, 1, 0
    %v221 = vcvt.s32.f32 %v217
    %v222 = vcvt.s32.f32 %v218
    %v223 = vcvt.s32.f32 %v219
    %v224 = vcvt.s32.f32 %v220
    %v225 = vsub.f32 %v209, %v221
    %v226 = vsub.f32 %v210, %v222
    %v227 = vsub.f32 %v211, %v223
    %v228 = vsub.f32 %v212, %v224
    %v229 = vmul.f32 %v201, 0.9
    %v230 = vmul.f32 %v202, 0.9
    %v231 = vmul.f32 %v203, 0.9
    %v232 = vmul.f32 %v204, 0.9
    %v233 = vadd.f32 %v229, %v221
    %v234 = vadd.f32 %v230, %v222
    %v235 = vadd.f32 %v231, %v223
    %v236 = vadd.f32 %v232, %v224
    %v237 = vmul.f32 %v225, 0.9
    %v238 = vmul.f32 %v226, 0.9
    %v239 = vmul.f32 %v227, 0.9
    %v240 = vmul.f32 %v228, 0.9
    %v241 = vadd.f32 %v237, %v131
    %v242 = vadd.f32 %v238, %v136
    %v243 = vadd.f32 %v239, %v141
    %v244 = vadd.f32 %v240, %v146
    %vm245 = vcmp.gt.f32.partialorder %v241, 1.0
    %vm246 = vcmp.gt.f32.partialorder %v242, 1.0
    %vm247 = vcmp.gt.f32.partialorder %v243, 1.0
    %vm248 = vcmp.gt.f32.partialorder %v244, 1.0
    %v249 = vsel %vm245, 1, 0
    %v250 = vsel %vm246, 1, 0
    %v251 = vsel %vm247, 1, 0
    %v252 = vsel %vm248, 1, 0
    %v253 = vcvt.s32.f32 %v249
    %v254 = vcvt.s32.f32 %v250
    %v255 = vcvt.s32.f32 %v251
    %v256 = vcvt.s32.f32 %v252
    %v257 = vsub.f32 %v241, %v253
    %v258 = vsub.f32 %v242, %v254
    %v259 = vsub.f32 %v243, %v255
    %v260 = vsub.f32 %v244, %v256
    %v261 = vmul.f32 %v233, 0.9
    %v262 = vmul.f32 %v234, 0.9
    %v263 = vmul.f32 %v235, 0.9
    %v264 = vmul.f32 %v236, 0.9
    %v265 = vadd.f32 %v261, %v253
    %v266 = vadd.f32 %v262, %v254
    %v267 = vadd.f32 %v263, %v255
    %v268 = vadd.f32 %v264, %v256
    %v269 = vmul.f32 %v257, 0.9
    %v270 = vmul.f32 %v258, 0.9
    %v271 = vmul.f32 %v259, 0.9
    %v272 = vmul.f32 %v260, 0.9
    %v273 = vadd.f32 %v269, %v131
    %v274 = vadd.f32 %v270, %v136
    %v275 = vadd.f32 %v271, %v141
    %v276 = vadd.f32 %v272, %v146
    %vm277 = vcmp.gt.f32.partialorder %v273, 1.0
    %vm278 = vcmp.gt.f32.partialorder %v274, 1.0
    %vm279 = vcmp.gt.f32.partialorder %v275, 1.0
    %vm280 = vcmp.gt.f32.partialorder %v276, 1.0
    %v281 = vsel %vm277, 1, 0
    %v282 = vsel %vm278, 1, 0
    %v283 = vsel %vm279, 1, 0
    %v284 = vsel %vm280, 1, 0
    %v285 = vcvt.s32.f32 %v281
    %v286 = vcvt.s32.f32 %v282
    %v287 = vcvt.s32.f32 %v283
    %v288 = vcvt.s32.f32 %v284
    %v289 = vsub.f32 %v273, %v285
    %v290 = vsub.f32 %v274, %v286
    %v291 = vsub.f32 %v275, %v287
    %v292 = vsub.f32 %v276, %v288
    %v293 = vmul.f32 %v265, 0.9
    %v294 = vmul.f32 %v266, 0.9
    %v295 = vmul.f32 %v267, 0.9
    %v296 = vmul.f32 %v268, 0.9
    %v297 = vadd.f32 %v293, %v285
    %v298 = vadd.f32 %v294, %v286
    %v299 = vadd.f32 %v295, %v287
    %v300 = vadd.f32 %v296, %v288
    %v301 = vmul.f32 %v289, 0.9
    %v302 = vmul.f32 %v290, 0.9
    %v303 = vmul.f32 %v291, 0.9
    %v304 = vmul.f32 %v292, 0.9
    %v305 = vadd.f32 %v301, %v131
    %v306 = vadd.f32 %v302, %v136
    %v307 = vadd.f32 %v303, %v141
    %v308 = vadd.f32 %v304, %v146
    %vm309 = vcmp.gt.f32.partialorder %v305, 1.0
    %vm310 = vcmp.gt.f32.partialorder %v306, 1.0
    %vm311 = vcmp.gt.f32.partialorder %v307, 1.0
    %vm312 = vcmp.gt.f32.partialorder %v308, 1.0
    %v313 = vsel %vm309, 1, 0
    %v314 = vsel %vm310, 1, 0
    %v315 = vsel %vm311, 1, 0
    %v316 = vsel %vm312, 1, 0
    %v317 = vcvt.s32.f32 %v313
    %v318 = vcvt.s32.f32 %v314
    %v319 = vcvt.s32.f32 %v315
    %v320 = vcvt.s32.f32 %v316
    %v321 = vsub.f32 %v305, %v317
    %v322 = vsub.f32 %v306, %v318
    %v323 = vsub.f32 %v307, %v319
    %v324 = vsub.f32 %v308, %v320
    %v325 = vmul.f32 %v297, 0.9
    %v326 = vmul.f32 %v298, 0.9
    %v327 = vmul.f32 %v299, 0.9
    %v328 = vmul.f32 %v300, 0.9
    %v329 = vadd.f32 %v325, %v317
    %v330 = vadd.f32 %v326, %v318
    %v331 = vadd.f32 %v327, %v319
    %v332 = vadd.f32 %v328, %v320
    %v333 = vmul.f32 %v321, 0.9
    %v334 = vmul.f32 %v322, 0.9
    %v335 = vmul.f32 %v323, 0.9
    %v336 = vmul.f32 %v324, 0.9
    %v337 = vadd.f32 %v333, %v131
    %v338 = vadd.f32 %v334, %v136
    %v339 = vadd.f32 %v335, %v141
    %v340 = vadd.f32 %v336, %v146
    %vm341 = vcmp.gt.f32.partialorder %v337, 1.0
    %vm342 = vcmp.gt.f32.partialorder %v338, 1.0
    %vm343 = vcmp.gt.f32.partialorder %v339, 1.0
    %vm344 = vcmp.gt.f32.partialorder %v340, 1.0
    %v345 = vsel %vm341, 1, 0
    %v346 = vsel %vm342, 1, 0
    %v347 = vsel %vm343, 1, 0
    %v348 = vsel %vm344, 1, 0
    %v349 = vcvt.s32.f32 %v345
    %v350 = vcvt.s32.f32 %v346
    %v351 = vcvt.s32.f32 %v347
    %v352 = vcvt.s32.f32 %v348
    %v353 = vsub.f32 %v337, %v349
    %v354 = vsub.f32 %v338, %v350
    %v355 = vsub.f32 %v339, %v351
    %v356 = vsub.f32 %v340, %v352
    %v357 = vmul.f32 %v329, 0.9
    %v358 = vmul.f32 %v330, 0.9
    %v359 = vmul.f32 %v331, 0.9
    %v360 = vmul.f32 %v332, 0.9
    %v361 = vadd.f32 %v357, %v349
    %v362 = vadd.f32 %v358, %v350
    %v363 = vadd.f32 %v359, %v351
    %v364 = vadd.f32 %v360, %v352
    %v365 = vmul.f32 %v353, 0.9
    %v366 = vmul.f32 %v354, 0.9
    %v367 = vmul.f32 %v355, 0.9
    %v368 = vmul.f32 %v356, 0.9
    %v369 = vadd.f32 %v365, %v131
    %v370 = vadd.f32 %v366, %v136
    %v371 = vadd.f32 %v367, %v141
    %v372 = vadd.f32 %v368, %v146
    %vm373 = vcmp.gt.f32.partialorder %v369, 1.0
    %vm374 = vcmp.gt.f32.partialorder %v370, 1.0
    %vm375 = vcmp.gt.f32.partialorder %v371, 1.0
    %vm376 = vcmp.gt.f32.partialorder %v372, 1.0
    %v377 = vsel %vm373, 1, 0
    %v378 = vsel %vm374, 1, 0
    %v379 = vsel %vm375, 1, 0
    %v380 = vsel %vm376, 1, 0
    %v381 = vcvt.s32.f32 %v377
    %v382 = vcvt.s32.f32 %v378
    %v383 = vcvt.s32.f32 %v379
    %v384 = vcvt.s32.f32 %v380
    %v385 = vsub.f32 %v369, %v381
    %v386 = vsub.f32 %v370, %v382
    %v387 = vsub.f32 %v371, %v383
    %v388 = vsub.f32 %v372, %v384
    %v389 = vmul.f32 %v361, 0.9
    %v390 = vmul.f32 %v362, 0.9
    %v391 = vmul.f32 %v363, 0.9
    %v392 = vmul.f32 %v364, 0.9
    %v393 = vadd.f32 %v389, %v381
    %v394 = vadd.f32 %v390, %v382
    %v395 = vadd.f32 %v391, %v383
    %v396 = vadd.f32 %v392, %v384
    %v397 = vmul.f32 %v385, 0.9
    %v398 = vmul.f32 %v386, 0.9
    %v399 = vmul.f32 %v387, 0.9
    %v400 = vmul.f32 %v388, 0.9
    %v401 = vadd.f32 %v397, %v131
    %v402 = vadd.f32 %v398, %v136
    %v403 = vadd.f32 %v399, %v141
    %v404 = vadd.f32 %v400, %v146
    %vm405 = vcmp.gt.f32.partialorder %v401, 1.0
    %vm406 = vcmp.gt.f32.partialorder %v402, 1.0
    %vm407 = vcmp.gt.f32.partialorder %v403, 1.0
    %vm408 = vcmp.gt.f32.partialorder %v404, 1.0
    %v409 = vsel %vm405, 1, 0
    %v410 = vsel %vm406, 1, 0
    %v411 = vsel %vm407, 1, 0
    %v412 = vsel %vm408, 1, 0
    %v413 = vcvt.s32.f32 %v409
    %v414 = vcvt.s32.f32 %v410
    %v415 = vcvt.s32.f32 %v411
    %v416 = vcvt.s32.f32 %v412
    %v417 = vsub.f32 %v401, %v413
    %v418 = vsub.f32 %v402, %v414
    %v419 = vsub.f32 %v403, %v415
    %v420 = vsub.f32 %v404, %v416
    %v421 = vmul.f32 %v393, 0.9
    %v422 = vmul.f32 %v394, 0.9
    %v423 = vmul.f32 %v395, 0.9
    %v424 = vmul.f32 %v396, 0.9
    %v425 = vadd.f32 %v421, %v413
    %v426 = vadd.f32 %v422, %v414
    %v427 = vadd.f32 %v423, %v415
    %v428 = vadd.f32 %v424, %v416
    %v429 = vmul.f32 %v417, 0.9
    %v430 = vmul.f32 %v418, 0.9
    %v431 = vmul.f32 %v419, 0.9
    %v432 = vmul.f32 %v420, 0.9
    %v433 = vadd.f32 %v429, %v131
    %v434 = vadd.f32 %v430, %v136
    %v435 = vadd.f32 %v431, %v141
    %v436 = vadd.f32 %v432, %v146
    %vm437 = vcmp.gt.f32.partialorder %v433, 1.0
    %vm438 = vcmp.gt.f32.partialorder %v434, 1.0
    %vm439 = vcmp.gt.f32.partialorder %v435, 1.0
    %vm440 = vcmp.gt.f32.partialorder %v436, 1.0
    %v441 = vsel %vm437, 1, 0
    %v442 = vsel %vm438, 1, 0
    %v443 = vsel %vm439, 1, 0
    %v444 = vsel %vm440, 1, 0
    %v445 = vcvt.s32.f32 %v441
    %v446 = vcvt.s32.f32 %v442
    %v447 = vcvt.s32.f32 %v443
    %v448 = vcvt.s32.f32 %v444
    %v449 = vsub.f32 %v433, %v445
    %v450 = vsub.f32 %v434, %v446
    %v451 = vsub.f32 %v435, %v447
    %v452 = vsub.f32 %v436, %v448
    %v453 = vmul.f32 %v425, 0.9
    %v454 = vmul.f32 %v426, 0.9
    %v455 = vmul.f32 %v427, 0.9
    %v456 = vmul.f32 %v428, 0.9
    %v457 = vadd.f32 %v453, %v445
    %v458 = vadd.f32 %v454, %v446
    %v459 = vadd.f32 %v455, %v447
    %v460 = vadd.f32 %v456, %v448
    %v461 = vmul.f32 %v449, 0.9
    %v462 = vmul.f32 %v450, 0.9
    %v463 = vmul.f32 %v451, 0.9
    %v464 = vmul.f32 %v452, 0.9
    %v465 = vadd.f32 %v461, %v131
    %v466 = vadd.f32 %v462, %v136
    %v467 = vadd.f32 %v463, %v141
    %v468 = vadd.f32 %v464, %v146
    %vm469 = vcmp.gt.f32.partialorder %v465, 1.0
    %vm470 = vcmp.gt.f32.partialorder %v466, 1.0
    %vm471 = vcmp.gt.f32.partialorder %v467, 1.0
    %vm472 = vcmp.gt.f32.partialorder %v468, 1.0
    %v473 = vsel %vm469, 1, 0
    %v474 = vsel %vm470, 1, 0
    %v475 = vsel %vm471, 1, 0
    %v476 = vsel %vm472, 1, 0
    %v477 = vcvt.s32.f32 %v473
    %v478 = vcvt.s32.f32 %v474
    %v479 = vcvt.s32.f32 %v475
    %v480 = vcvt.s32.f32 %v476
    %v481 = vsub.f32 %v465, %v477
    %v482 = vsub.f32 %v466, %v478
    %v483 = vsub.f32 %v467, %v479
    %v484 = vsub.f32 %v468, %v480
    %v485 = vmul.f32 %v457, 0.9
    %v486 = vmul.f32 %v458, 0.9
    %v487 = vmul.f32 %v459, 0.9
    %v488 = vmul.f32 %v460, 0.9
    %v489 = vadd.f32 %v485, %v477
    %v490 = vadd.f32 %v486, %v478
    %v491 = vadd.f32 %v487, %v479
    %v492 = vadd.f32 %v488, %v480
    %v493 = vmul.f32 %v481, 0.9
    %v494 = vmul.f32 %v482, 0.9
    %v495 = vmul.f32 %v483, 0.9
    %v496 = vmul.f32 %v484, 0.9
    %v497 = vadd.f32 %v493, %v131
    %v498 = vadd.f32 %v494, %v136
    %v499 = vadd.f32 %v495, %v141
    %v500 = vadd.f32 %v496, %v146
    %vm501 = vcmp.gt.f32.partialorder %v497, 1.0
    %vm502 = vcmp.gt.f32.partialorder %v498, 1.0
    %vm503 = vcmp.gt.f32.partialorder %v499, 1.0
    %vm504 = vcmp.gt.f32.partialorder %v500, 1.0
    %v505 = vsel %vm501, 1, 0
    %v506 = vsel %vm502, 1, 0
    %v507 = vsel %vm503, 1, 0
    %v508 = vsel %vm504, 1, 0
    %v509 = vcvt.s32.f32 %v505
    %v510 = vcvt.s32.f32 %v506
    %v511 = vcvt.s32.f32 %v507
    %v512 = vcvt.s32.f32 %v508
    %v513 = vsub.f32 %v497, %v509
    %v514 = vsub.f32 %v498, %v510
    %v515 = vsub.f32 %v499, %v511
    %v516 = vsub.f32 %v500, %v512
    %v517 = vmul.f32 %v489, 0.9
    %v518 = vmul.f32 %v490, 0.9
    %v519 = vmul.f32 %v491, 0.9
    %v520 = vmul.f32 %v492, 0.9
    %v521 = vadd.f32 %v517, %v509
    %v522 = vadd.f32 %v518, %v510
    %v523 = vadd.f32 %v519, %v511
    %v524 = vadd.f32 %v520, %v512
    %v525 = vmul.f32 %v513, 0.9
    %v526 = vmul.f32 %v514, 0.9
    %v527 = vmul.f32 %v515, 0.9
    %v528 = vmul.f32 %v516, 0.9
    %v529 = vadd.f32 %v525, %v131
    %v530 = vadd.f32 %v526, %v136
    %v531 = vadd.f32 %v527, %v141
    %v532 = vadd.f32 %v528, %v146
    %vm533 = vcmp.gt.f32.partialorder %v529, 1.0
    %vm534 = vcmp.gt.f32.partialorder %v530, 1.0
    %vm535 = vcmp.gt.f32.partialorder %v531, 1.0
    %vm536 = vcmp.gt.f32.partialorder %v532, 1.0
    %v537 = vsel %vm533, 1, 0
    %v538 = vsel %vm534, 1, 0
    %v539 = vsel %vm535, 1, 0
    %v540 = vsel %vm536, 1, 0
    %v541 = vcvt.s32.f32 %v537
    %v542 = vcvt.s32.f32 %v538
    %v543 = vcvt.s32.f32 %v539
    %v544 = vcvt.s32.f32 %v540
    %v545 = vsub.f32 %v529, %v541
    %v546 = vsub.f32 %v530, %v542
    %v547 = vsub.f32 %v531, %v543
    %v548 = vsub.f32 %v532, %v544
    %v549 = vmul.f32 %v521, 0.9
    %v550 = vmul.f32 %v522, 0.9
    %v551 = vmul.f32 %v523, 0.9
    %v552 = vmul.f32 %v524, 0.9
    %v553 = vadd.f32 %v549, %v541
    %v554 = vadd.f32 %v550, %v542
    %v555 = vadd.f32 %v551, %v543
    %v556 = vadd.f32 %v552, %v544
    %v557 = vmul.f32 %v545, 0.9
    %v558 = vmul.f32 %v546, 0.9
    %v559 = vmul.f32 %v547, 0.9
    %v560 = vmul.f32 %v548, 0.9
    %v561 = vadd.f32 %v557, %v131
    %v562 = vadd.f32 %v558, %v136
    %v563 = vadd.f32 %v559, %v141
    %v564 = vadd.f32 %v560, %v146
    %vm565 = vcmp.gt.f32.partialorder %v561, 1.0
    %vm566 = vcmp.gt.f32.partialorder %v562, 1.0
    %vm567 = vcmp.gt.f32.partialorder %v563, 1.0
    %vm568 = vcmp.gt.f32.partialorder %v564, 1.0
    %v569 = vsel %vm565, 1, 0
    %v570 = vsel %vm566, 1, 0
    %v571 = vsel %vm567, 1, 0
    %v572 = vsel %vm568, 1, 0
    %v573 = vcvt.s32.f32 %v569
    %v574 = vcvt.s32.f32 %v570
    %v575 = vcvt.s32.f32 %v571
    %v576 = vcvt.s32.f32 %v572
    %v577 = vsub.f32 %v561, %v573
    %v578 = vsub.f32 %v562, %v574
    %v579 = vsub.f32 %v563, %v575
    %v580 = vsub.f32 %v564, %v576
    %v581 = vmul.f32 %v553, 0.9
    %v582 = vmul.f32 %v554, 0.9
    %v583 = vmul.f32 %v555, 0.9
    %v584 = vmul.f32 %v556, 0.9
    %v585 = vadd.f32 %v581, %v573
    %v586 = vadd.f32 %v582, %v574
    %v587 = vadd.f32 %v583, %v575
    %v588 = vadd.f32 %v584, %v576
    %v589 = vmul.f32 %v577, 0.9
    %v590 = vmul.f32 %v578, 0.9
    %v591 = vmul.f32 %v579, 0.9
    %v592 = vmul.f32 %v580, 0.9
    %v593 = vadd.f32 %v589, %v131
    %v594 = vadd.f32 %v590, %v136
    %v595 = vadd.f32 %v591, %v141
    %v596 = vadd.f32 %v592, %v146
    %vm597 = vcmp.gt.f32.partialorder %v593, 1.0
    %vm598 = vcmp.gt.f32.partialorder %v594, 1.0
    %vm599 = vcmp.gt.f32.partialorder %v595, 1.0
    %vm600 = vcmp.gt.f32.partialorder %v596, 1.0
    %v601 = vsel %vm597, 1, 0
    %v602 = vsel %vm598, 1, 0
    %v603 = vsel %vm599, 1, 0
    %v604 = vsel %vm600, 1, 0
    %v605 = vcvt.s32.f32 %v601
    %v606 = vcvt.s32.f32 %v602
    %v607 = vcvt.s32.f32 %v603
    %v608 = vcvt.s32.f32 %v604
    %v609 = vsub.f32 %v593, %v605
    %v610 = vsub.f32 %v594, %v606
    %v611 = vsub.f32 %v595, %v607
    %v612 = vsub.f32 %v596, %v608
    %v613 = vmul.f32 %v585, 0.9
    %v614 = vmul.f32 %v586, 0.9
    %v615 = vmul.f32 %v587, 0.9
    %v616 = vmul.f32 %v588, 0.9
    %v617 = vadd.f32 %v613, %v605
    %v618 = vadd.f32 %v614, %v606
    %v619 = vadd.f32 %v615, %v607
    %v620 = vadd.f32 %v616, %v608
    %v621 = vmul.f32 %v609, 0.9
    %v622 = vmul.f32 %v610, 0.9
    %v623 = vmul.f32 %v611, 0.9
    %v624 = vmul.f32 %v612, 0.9
    %v625 = vadd.f32 %v621, %v131
    %v626 = vadd.f32 %v622, %v136
    %v627 = vadd.f32 %v623, %v141
    %v628 = vadd.f32 %v624, %v146
    %vm629 = vcmp.gt.f32.partialorder %v625, 1.0
    %vm630 = vcmp.gt.f32.partialorder %v626, 1.0
    %vm631 = vcmp.gt.f32.partialorder %v627, 1.0
    %vm632 = vcmp.gt.f32.partialorder %v628, 1.0
    %v633 = vsel %vm629, 1, 0
    %v634 = vsel %vm630, 1, 0
    %v635 = vsel %vm631, 1, 0
    %v636 = vsel %vm632, 1, 0
    %v637 = vcvt.s32.f32 %v633
    %v638 = vcvt.s32.f32 %v634
    %v639 = vcvt.s32.f32 %v635
    %v640 = vcvt.s32.f32 %v636
    %v641 = vsub.f32 %v625, %v637
    %v642 = vsub.f32 %v626, %v638
    %v643 = vsub.f32 %v627, %v639
    %v644 = vsub.f32 %v628, %v640
    %v645 = vmul.f32 %v617, 0.9
    %v646 = vmul.f32 %v618, 0.9
    %v647 = vmul.f32 %v619, 0.9
    %v648 = vmul.f32 %v620, 0.9
    %v649 = vadd.f32 %v645, %v637
    %v650 = vadd.f32 %v646, %v638
    %v651 = vadd.f32 %v647, %v639
    %v652 = vadd.f32 %v648, %v640
    %v653 = vmul.f32 %v641, 0.9
    %v654 = vmul.f32 %v642, 0.9
    %v655 = vmul.f32 %v643, 0.9
    %v656 = vmul.f32 %v644, 0.9
    %v657 = vadd.f32 %v653, %v131
    %v658 = vadd.f32 %v654, %v136
    %v659 = vadd.f32 %v655, %v141
    %v660 = vadd.f32 %v656, %v146
    %vm661 = vcmp.gt.f32.partialorder %v657, 1.0
    %vm662 = vcmp.gt.f32.partialorder %v658, 1.0
    %vm663 = vcmp.gt.f32.partialorder %v659, 1.0
    %vm664 = vcmp.gt.f32.partialorder %v660, 1.0
    %v665 = vsel %vm661, 1, 0
    %v666 = vsel %vm662, 1, 0
    %v667 = vsel %vm663, 1, 0
    %v668 = vsel %vm664, 1, 0
    %v669 = vcvt.s32.f32 %v665
    %v670 = vcvt.s32.f32 %v666
    %v671 = vcvt.s32.f32 %v667
    %v672 = vcvt.s32.f32 %v668
    %v673 = vsub.f32 %v657, %v669
    %v674 = vsub.f32 %v658, %v670
    %v675 = vsub.f32 %v659, %v671
    %v676 = vsub.f32 %v660, %v672
    %v677 = vmul.f32 %v649, 0.9
    %v678 = vmul.f32 %v650, 0.9
    %v679 = vmul.f32 %v651, 0.9
    %v680 = vmul.f32 %v652, 0.9
    %v681 = vadd.f32 %v677, %v669
    %v682 = vadd.f32 %v678, %v670
    %v683 = vadd.f32 %v679, %v671
    %v684 = vadd.f32 %v680, %v672
    %v685 = vmul.f32 %v673, 0.9
    %v686 = vmul.f32 %v674, 0.9
    %v687 = vmul.f32 %v675, 0.9
    %v688 = vmul.f32 %v676, 0.9
    %v689 = vadd.f32 %v685, %v131
    %v690 = vadd.f32 %v686, %v136
    %v691 = vadd.f32 %v687, %v141
    %v692 = vadd.f32 %v688, %v146
    %vm693 = vcmp.gt.f32.partialorder %v689, 1.0
    %vm694 = vcmp.gt.f32.partialorder %v690, 1.0
    %vm695 = vcmp.gt.f32.partialorder %v691, 1.0
    %vm696 = vcmp.gt.f32.partialorder %v692, 1.0
    %v697 = vsel %vm693, 1, 0
    %v698 = vsel %vm694, 1, 0
    %v699 = vsel %vm695, 1, 0
    %v700 = vsel %vm696, 1, 0
    %v701 = vcvt.s32.f32 %v697
    %v702 = vcvt.s32.f32 %v698
    %v703 = vcvt.s32.f32 %v699
    %v704 = vcvt.s32.f32 %v700
    %v705 = vsub.f32 %v689, %v701
    %v706 = vsub.f32 %v690, %v702
    %v707 = vsub.f32 %v691, %v703
    %v708 = vsub.f32 %v692, %v704
    %v709 = vmul.f32 %v681, 0.9
    %v710 = vmul.f32 %v682, 0.9
    %v711 = vmul.f32 %v683, 0.9
    %v712 = vmul.f32 %v684, 0.9
    %v713 = vadd.f32 %v709, %v701
    %v714 = vadd.f32 %v710, %v702
    %v715 = vadd.f32 %v711, %v703
    %v716 = vadd.f32 %v712, %v704
    %v717 = vmul.f32 %v705, 0.9
    %v718 = vmul.f32 %v706, 0.9
    %v719 = vmul.f32 %v707, 0.9
    %v720 = vmul.f32 %v708, 0.9
    %v721 = vadd.f32 %v717, %v131
    %v722 = vadd.f32 %v718, %v136
    %v723 = vadd.f32 %v719, %v141
    %v724 = vadd.f32 %v720, %v146
    %vm725 = vcmp.gt.f32.partialorder %v721, 1.0
    %vm726 = vcmp.gt.f32.partialorder %v722, 1.0
    %vm727 = vcmp.gt.f32.partialorder %v723, 1.0
    %vm728 = vcmp.gt.f32.partialorder %v724, 1.0
    %v729 = vsel %vm725, 1, 0
    %v730 = vsel %vm726, 1, 0
    %v731 = vsel %vm727, 1, 0
    %v732 = vsel %vm728, 1, 0
    %v733 = vcvt.s32.f32 %v729
    %v734 = vcvt.s32.f32 %v730
    %v735 = vcvt.s32.f32 %v731
    %v736 = vcvt.s32.f32 %v732
    %v737 = vsub.f32 %v721, %v733
    %v738 = vsub.f32 %v722, %v734
    %v739 = vsub.f32 %v723, %v735
    %v740 = vsub.f32 %v724, %v736
    %v741 = vmul.f32 %v713, 0.9
    %v742 = vmul.f32 %v714, 0.9
    %v743 = vmul.f32 %v715, 0.9
    %v744 = vmul.f32 %v716, 0.9
    %v745 = vadd.f32 %v741, %v733
    %v746 = vadd.f32 %v742, %v734
    %v747 = vadd.f32 %v743, %v735
    %v748 = vadd.f32 %v744, %v736
    %v749 = vmul.f32 %v737, 0.9
    %v750 = vmul.f32 %v738, 0.9
    %v751 = vmul.f32 %v739, 0.9
    %v752 = vmul.f32 %v740, 0.9
    %v753 = vadd.f32 %v749, %v131
    %v754 = vadd.f32 %v750, %v136
    %v755 = vadd.f32 %v751, %v141
    %v756 = vadd.f32 %v752, %v146
    %vm757 = vcmp.gt.f32.partialorder %v753, 1.0
    %vm758 = vcmp.gt.f32.partialorder %v754, 1.0
    %vm759 = vcmp.gt.f32.partialorder %v755, 1.0
    %vm760 = vcmp.gt.f32.partialorder %v756, 1.0
    %v761 = vsel %vm757, 1, 0
    %v762 = vsel %vm758, 1, 0
    %v763 = vsel %vm759, 1, 0
    %v764 = vsel %vm760, 1, 0
    %v765 = vcvt.s32.f32 %v761
    %v766 = vcvt.s32.f32 %v762
    %v767 = vcvt.s32.f32 %v763
    %v768 = vcvt.s32.f32 %v764
    %v769 = vmul.f32 %v745, 0.9
    %v770 = vmul.f32 %v746, 0.9
    %v771 = vmul.f32 %v747, 0.9
    %v772 = vmul.f32 %v748, 0.9
    %v773 = vadd.f32 %v769, %v765
    %v774 = vadd.f32 %v770, %v766
    %v775 = vadd.f32 %v771, %v767
    %v776 = vadd.f32 %v772, %v768
    %v777 = vld [vmem:[%s3] sm:$0xff]
    %v778 = vld [vmem:[%s4] sm:$0xff]
    %780 = vset.pattern.permute.xlu0 0
    %781 = vperm.xlu0 %780, %v778
    %v782 = vpop.permute.xlu0 %781
    %vm784 = vcmask 261120
    %v786 = vsel %vm784, %v777, 0
    %788 = vmatprep.subr.mxu0 0.0
    %789 = vmatpush1.msra.mxu0 0.0
    %790 = vmatprep.subr.mxu0 0.0
    %791 = vmatpush1.msra.mxu0 0.0
    %792 = vmatprep.subr.mxu0 0.0
    %793 = vmatpush1.msra.mxu0 0.0
    %794 = vmatprep.subr.mxu0 0.0
    %795 = vmatpush1.msra.mxu0 0.0
    %796 = vmatprep.subr.mxu0 0.0
    %797 = vmatpush1.msra.mxu0 0.0
    %798 = vmatprep.subr.mxu0 0.0
    %799 = vmatpush1.msra.mxu0 0.0
    %800 = vmatprep.subr.mxu0 0.0
    %801 = vmatpush1.msra.mxu0 0.0
    %802 = vmatprep.subr.mxu0 0.0
    %803 = vmatpush1.msra.mxu0 0.0
    %804 = vmatprep.subr.mxu0 0.0
    %805 = vmatpush1.msra.mxu0 0.0
    %806 = vmatprep.subr.mxu0 0.0
    %807 = vmatpush1.msra.mxu0 0.0
    %808 = vmatprep.subr.mxu0 0.0
    %809 = vmatpush1.msra.mxu0 0.0
    %810 = vmatprep.subr.mxu0 0.0
    %811 = vmatpush1.msra.mxu0 0.0
    %812 = vmatprep.subr.mxu0 0.0
    %813 = vmatpush1.msra.mxu0 %v776
    %814 = vmatprep.subr.mxu0 0.0
    %815 = vmatpush1.msra.mxu0 %v775
    %816 = vmatprep.subr.mxu0 0.0
    %817 = vmatpush1.msra.mxu0 %v774
    %818 = vmatprep.subr.mxu0 0.0
    %819 = vmatpush1.msra.mxu0 %v773
    %820 = vmatprep.subr.mxu0 0.0
    %821 = vmatpush2.msra.mxu0 0.0
    %822 = vmatprep.subr.mxu0 0.0
    %823 = vmatpush2.msra.mxu0 0.0
    %824 = vmatprep.subr.mxu0 0.0
    %825 = vmatpush2.msra.mxu0 0.0
    %826 = vmatprep.subr.mxu0 0.0
    %827 = vmatpush2.msra.mxu0 0.0
    %828 = vmatprep.subr.mxu0 0.0
    %829 = vmatpush2.msra.mxu0 0.0
    %830 = vmatprep.subr.mxu0 0.0
    %831 = vmatpush2.msra.mxu0 0.0
    %832 = vmatprep.subr.mxu0 0.0
    %833 = vmatpush2.msra.mxu0 0.0
    %834 = vmatprep.subr.mxu0 0.0
    %835 = vmatpush2.msra.mxu0 0.0
    %836 = vmatprep.subr.mxu0 0.0
    %837 = vmatpush2.msra.mxu0 0.0
    %838 = vmatprep.subr.mxu0 0.0
    %839 = vmatpush2.msra.mxu0 0.0
    %840 = vmatprep.subr.mxu0 0.0
    %841 = vmatpush2.msra.mxu0 0.0
    %842 = vmatprep.subr.mxu0 0.0
    %843 = vmatpush2.msra.mxu0 0.0
    %844 = vmatprep.subr.mxu0 0.0
    %845 = vmatpush2.msra.mxu0 0.0
    %846 = vmatprep.subr.mxu0 0.0
    %847 = vmatpush2.msra.mxu0 0.0
    %848 = vmatprep.subr.mxu0 0.0
    %849 = vmatpush2.msra.mxu0 0.0
    %850 = vmatprep.subr.mxu0 0.0
    %851 = vmatpush2.msra.mxu0 0.0
    %852 = vmatprep.mubr.f32.mxu0 0.0
    %853 = vmatmul.mubr.f32.gmra.mxu0 %v786
    %v854 = vpop.f32.mrf.mxu0
    %v855 = vadd.f32 %v782, %v854
    %v856 = vpop.f32.mrf.mxu0
    %857 = vdwg.mxu0
    %858 = vst [vmem:[#allocation2] sm:$0xff] %v855
    // Predicated region
    $region22: #{tpu_custom_call.1} parent=1 // pred_check
      _
    $region23: #{tpu_custom_call.1} parent=1 // pred_check_branch
      %860 = sbr.rel (0) target = $region25
    $region24: #{tpu_custom_call.1} parent=1 // pred_region
      %s862 = ssub.s32 128, 128
      %863 = vsyncadd [#allocation3], %s862
      %s865 = sshll.u32 [#allocation2], 4
      %s866 = int_to_ptr.vmem [resolvable:$true] %s865
      %868 = dma.vmem_to_hbm [thread:$0]  %s866, 128, %s5, [#allocation3]
    $region25: #{tpu_custom_call.1} parent=1 // pred_fallthru
      _
    // Predicated region
    $region26: #{tpu_custom_call.1} parent=1 // pred_check
      _
    $region27: #{tpu_custom_call.1} parent=1 // pred_check_branch
      %870 = sbr.rel (0) target = $region29
    $region28: #{tpu_custom_call.1} parent=1 // pred_region
      %871 = dma.done [#allocation3], 128
    $region29: #{tpu_custom_call.1} parent=1 // pred_fallthru
      _
    %872 = vsyncpa [#allocation3], 1

</llo_original>
